<compile_context>
chip_gen: v7x
topology: tpu7x:2x2x1
jax: 0.10.0
libtpu: 0.0.40
codegen_flags: <defaults>
</compile_context>

<pallas_src>
import numpy as np
import jax
import jax.numpy as jnp
from jax.experimental import pallas as pl
from jax.experimental.pallas import tpu as pltpu


def _round_up(n: int, m: int) -> int:
    return ((n + m - 1) // m) * m


def dien_attention(x, q, w1, b1, w2, b2, alpha, *, tile_t=None, eps=1e-8):
    """Un-normalized attention logits for every packed timestep.

    x:     [T, D1]  packed GRU hidden states (PackedSequence .data)
    q:     [T, D2]  behaviour-ad embedding, repeated per packed timestep
    w1:    [D1 + D1*D2 + D2, A], b1: [1, A]   first Linear
    w2:    [A, 1],               b2: [1, 1]   second Linear
    alpha: [A]      per-feature Dice alpha
    returns [T, 1] float32
    """
    T, d1 = x.shape
    d2 = q.shape[1]
    A = w1.shape[1]
    d_in = d1 + d1 * d2 + d2
    assert w1.shape[0] == d_in

    if tile_t is None:
        # Single tile for small T; per-grid-step overhead dominates small tiles.
        tile_t = min(_round_up(max(T, 1), 128), 1024)
    assert tile_t % 128 == 0, "tile_t must be a multiple of 128 lanes"

    f32 = jnp.float32
    bf16 = jnp.bfloat16
    d1p = _round_up(d1, 8)                  # sublane-aligned x block
    d2p = _round_up(d2, 8)                  # sublane-aligned q block
    # Broadcast the interaction over the smaller embedding dim -> fewer, fuller
    # 8-row sub-blocks (smaller matmul K, less fill vst traffic).
    use_q_major = d2 * d1p <= d1 * d2p
    k_pad = d1p + (d2 * d1p if use_q_major else d1 * d2p) + d2p
    t_pad = _round_up(max(T, 1), tile_t)
    n_tiles = t_pad // tile_t

    # ---- host-side (plain XLA) operand prep ----------------------------------
    # x / q transposed (T lane-dense) and concatenated: one streamed block/step.
    xqT = jnp.zeros((d1p + d2p, t_pad), f32)
    xqT = xqT.at[:d1, :T].set(x.T.astype(f32))
    xqT = xqT.at[d1p:d1p + d2, :T].set(q.T.astype(f32))

    # Scatter W1 rows into the padded feature-row layout used by the in-kernel
    # fill; padded rows map to an appended zero row.  Stored bf16 for the MXU.
    src_idx = np.full((k_pad,), d_in, dtype=np.int32)
    src_idx[:d1] = np.arange(d1)
    src_idx[k_pad - d2p:k_pad - d2p + d2] = d1 + d1 * d2 + np.arange(d2)
    for i in range(d1):
        for j in range(d2):
            dst = (d1p + j * d1p + i) if use_q_major else (d1p + i * d2p + j)
            src_idx[dst] = d1 + i * d2 + j
    w1_ext = jnp.concatenate([w1.astype(f32), jnp.zeros((1, A), f32)], axis=0)
    w1T = w1_ext[src_idx].T.astype(bf16)            # [A, k_pad]  bf16 MXU operand

    # b1 / alpha / w2 / b2 packed into one resident [A, 4] tile.
    params = jnp.zeros((A, 4), f32)
    params = params.at[:, 0].set(b1.reshape(A).astype(f32))
    params = params.at[:, 1].set(alpha.reshape(A).astype(f32))
    params = params.at[:, 2].set(w2.reshape(A).astype(f32))
    params = params.at[0, 3].set(b2.reshape(()).astype(f32))

    cnt = float(T)

    def kernel(xq_ref, w1_ref, par_ref, out_ref,
               h_ref, sum_ref, sq_ref, mean_ref, rstd_ref):
        ph = pl.program_id(0)        # 0: accumulate global Dice stats, 1: main
        i = pl.program_id(1)         # timestep tile

        x_blk = xq_ref[0:d1p, :]                     # [d1p, tile_t] f32
        q_blk = xq_ref[d1p:d1p + d2p, :]             # [d2p, tile_t] f32

        # hT = [x | x (x) q | q] (transposed), 8-row-aligned sub-blocks.
        # TODO(synk): a stride-0 pl.ds load could replace the vreg sublane
        # broadcast below if the fill ever shows up as XLU-bound.
        h_ref[0:d1p, :] = x_blk
        if use_q_major:
            for j in range(d2):
                h_ref[d1p + j * d1p:d1p + (j + 1) * d1p, :] = x_blk * q_blk[j:j + 1, :]
        else:
            for r in range(d1):
                h_ref[d1p + r * d2p:d1p + (r + 1) * d2p, :] = q_blk * x_blk[r:r + 1, :]
        h_ref[k_pad - d2p:k_pad, :] = q_blk

        # First Linear (bias-free) as ONE bf16 MXU matmul, f32 accumulate.
        m = jnp.dot(w1_ref[...], h_ref[...].astype(bf16),
                    preferred_element_type=jnp.float32)          # [A, tile_t]

        # ---- phase 0: global Dice batch statistics ----------------------------
        @pl.when((ph == 0) & (i == 0))
        def _init():
            sum_ref[...] = jnp.zeros_like(sum_ref)
            sq_ref[...] = jnp.zeros_like(sq_ref)

        @pl.when(ph == 0)
        def _stats():
            # Padded timesteps have all-zero inputs -> m == 0 exactly, so no
            # mask is needed (we divide by the true count T, not t_pad).
            sum_ref[...] += jnp.sum(m, axis=1, keepdims=True)
            sq_ref[...] += jnp.sum(m * m, axis=1, keepdims=True)
            out_ref[...] = jnp.zeros_like(out_ref)   # benign; overwritten in phase 1

        # ---- phase 1: Dice + second Linear ------------------------------------
        @pl.when((ph == 1) & (i == 0))
        def _finalize_stats():
            mu = sum_ref[...] * (1.0 / cnt)          # mean of (z - b1)
            var = jnp.maximum(sq_ref[...] * (1.0 / cnt) - mu * mu, 0.0)
            mean_ref[...] = mu
            rstd_ref[...] = jax.lax.rsqrt(var + jnp.float32(eps))

        @pl.when(ph == 1)
        def _main():
            b1c = par_ref[:, 0:1]
            alphac = par_ref[:, 1:2]
            w2c = par_ref[:, 2:3]
            b2s = par_ref[0:1, 3:4]
            z = m + b1c
            nz = (m - mean_ref[...]) * rstd_ref[...]   # == (z - mean_z) * rstd
            pg = jax.nn.sigmoid(nz)
            zd = (pg + alphac * (1.0 - pg)) * z
            # Second Linear (A -> 1) as a VPU multiply + sublane reduce: the
            # output row stays lane-dense and the MXU stays free.
            logit = jnp.sum(zd * w2c, axis=0, keepdims=True) + b2s
            out_ref[...] = logit.astype(out_ref.dtype)

    stream = pl.BlockSpec((d1p + d2p, tile_t), lambda ph, i: (0, i))
    resident = lambda shape: pl.BlockSpec(shape, lambda ph, i: (0, 0))

    cost = pl.CostEstimate(
        flops=int(2 * (2 * A * k_pad * t_pad) + 10 * A * t_pad),
        transcendentals=int(A * t_pad),
        bytes_accessed=int(4 * (2 * xqT.size + t_pad + params.size) + 2 * w1T.size),
    )

    out_row = pl.pallas_call(
        kernel,
        out_shape=jax.ShapeDtypeStruct((1, t_pad), f32),
        grid=(2, n_tiles),
        in_specs=[stream, resident((A, k_pad)), resident((A, 4))],
        out_specs=pl.BlockSpec((1, tile_t), lambda ph, i: (0, i)),
        scratch_shapes=[pltpu.VMEM((k_pad, tile_t), f32),   # packed feature tile
                        pltpu.VMEM((A, 1), f32),            # running sum
                        pltpu.VMEM((A, 1), f32),            # running sum of squares
                        pltpu.VMEM((A, 1), f32),            # mean
                        pltpu.VMEM((A, 1), f32)],           # rstd
        compiler_params=pltpu.CompilerParams(
            dimension_semantics=("arbitrary", "arbitrary")),
        cost_estimate=cost,
    )(xqT, w1T, params)

    # lane-dense [1, t_pad] -> [T, 1]
    return out_row.reshape(t_pad, 1)[:T]


def reference(x, q, w1, b1, w2, b2, alpha, eps=1e-8):
    """Plain-JAX (f32) mirror of the torch forward, for a correctness check."""
    hp = jax.lax.Precision.HIGHEST
    T, d1 = x.shape
    d2 = q.shape[1]
    p = (x[:, :, None] * q[:, None, :]).reshape(T, d1 * d2)
    h = jnp.concatenate([x, p, q], axis=-1)
    z = jnp.dot(h, w1, precision=hp) + b1
    mean = jnp.mean(z, axis=0, keepdims=True)
    var = jnp.mean((z - mean) ** 2, axis=0, keepdims=True)   # biased
    nz = (z - mean) / jnp.sqrt(var + eps)
    pg = jax.nn.sigmoid(nz)
    zd = pg * z + alpha[None, :] * (1.0 - pg) * z
    return jnp.dot(zd, w2, precision=hp) + b2


if __name__ == "__main__":
    # ---- small shapes consistent with the module ----
    B = 8
    lengths = np.array([37, 23, 55, 11, 64, 48, 30, 20], dtype=np.int32)  # sum = 288
    D1, D2, A = 8, 4, 32                      # embed_dims=(8,4), attention_dim=32
    DIN = D1 + D2 + D1 * D2                   # 44

    key = jax.random.PRNGKey(0)
    k_h, k_q, k_w1, k_b1, k_w2, k_b2, k_a = jax.random.split(key, 7)

    max_len = int(lengths.max())
    H = jax.random.normal(k_h, (B, max_len, D1), dtype=jnp.float32)   # GRU hidden states
    query = jax.random.normal(k_q, (B, D2), dtype=jnp.float32)        # behaviour-ad embedding

    w1 = jax.random.normal(k_w1, (DIN, A), dtype=jnp.float32) * 0.1
    b1 = jax.random.normal(k_b1, (1, A), dtype=jnp.float32) * 0.01
    w2 = jax.random.normal(k_w2, (A, 1), dtype=jnp.float32) * 0.1
    b2 = jax.random.normal(k_b2, (1, 1), dtype=jnp.float32) * 0.01
    alpha = jax.random.uniform(k_a, (A,), dtype=jnp.float32) * 0.5    # per-feature Dice alpha

    # ---- host-side glue: emulate pack_padded_sequence(enforce_sorted=False) ----
    sorted_indices = np.argsort(-lengths, kind="stable")
    batch_sizes = np.array([(lengths > t).sum() for t in range(max_len)], dtype=np.int32)
    row_b, row_t = [], []
    for t in range(max_len):
        for b in range(int(batch_sizes[t])):
            row_b.append(int(sorted_indices[b]))
            row_t.append(t)
    x_packed = H[np.asarray(row_b), np.asarray(row_t)]                # [T, D1]

    # Mirror the torch forward's query re-indexing exactly.
    q_sorted = query[np.asarray(sorted_indices)]
    idx_list = []
    for bs in batch_sizes:
        idx_list.extend(range(int(bs)))
    q_aligned = q_sorted[np.asarray(idx_list)]                        # [T, D2]

    ref = reference(x_packed, q_aligned, w1, b1, w2, b2, alpha)

    # bf16 MXU operands vs the f32 reference -> a few-1e-3 absolute logit error
    # is expected; tolerance chosen accordingly.
    # Default adaptive tile (single tile per phase).
    att = dien_attention(x_packed, q_aligned, w1, b1, w2, b2, alpha)
    att = jax.block_until_ready(att)
    assert att.shape == (int(lengths.sum()), 1)
    np.testing.assert_allclose(np.asarray(att), np.asarray(ref), rtol=2e-2, atol=1e-2)

    # Small tile to exercise the multi-tile (grid=(2, 3)) path as well.
    att_multi = dien_attention(x_packed, q_aligned, w1, b1, w2, b2, alpha, tile_t=128)
    att_multi = jax.block_until_ready(att_multi)
    np.testing.assert_allclose(np.asarray(att_multi), np.asarray(ref), rtol=2e-2, atol=1e-2)

    print("KERNEL_OK")
</pallas_src>

<mosaic_0001>
module attributes {stable_mosaic.version = 11 : i64} {
  func.func @kernel(%arg0: i32, %arg1: i32, %arg2: memref<16x384xf32, #tpu.memory_space<vmem>>, %arg3: memref<32x48xbf16, #tpu.memory_space<vmem>>, %arg4: memref<32x4xf32, #tpu.memory_space<vmem>>, %arg5: memref<1x384xf32, #tpu.memory_space<vmem>>, %arg6: memref<48x384xf32, #tpu.memory_space<vmem>>, %arg7: memref<32x1xf32, #tpu.memory_space<vmem>>, %arg8: memref<32x1xf32, #tpu.memory_space<vmem>>, %arg9: memref<32x1xf32, #tpu.memory_space<vmem>>, %arg10: memref<32x1xf32, #tpu.memory_space<vmem>>) attributes {dimension_semantics = [#tpu.dimension_semantics<arbitrary>, #tpu.dimension_semantics<arbitrary>], iteration_bounds = array<i64: 2, 1>, scalar_prefetch = 0 : i64, scratch_operands = 5 : i64, tpu.core_type = #tpu.core_type<tc>, window_params = [{transform_indices = @transform_0, window_bounds = array<i64: 16, 384>}, {pipeline_mode = #tpu.pipeline_mode<synchronous>, transform_indices = @transform_1, window_bounds = array<i64: 32, 48>}, {pipeline_mode = #tpu.pipeline_mode<synchronous>, transform_indices = @transform_2, window_bounds = array<i64: 32, 4>}, {transform_indices = @transform_3, window_bounds = array<i64: 1, 384>}]} {
    %c0 = arith.constant 0 : index
    %c0_0 = arith.constant 0 : index
    %0 = vector.load %arg2[%c0, %c0_0] : memref<16x384xf32, #tpu.memory_space<vmem>>, vector<8x384xf32>
    %c8 = arith.constant 8 : index
    %c0_1 = arith.constant 0 : index
    %1 = vector.load %arg2[%c8, %c0_1] : memref<16x384xf32, #tpu.memory_space<vmem>>, vector<8x384xf32>
    %c0_2 = arith.constant 0 : index
    %c0_3 = arith.constant 0 : index
    %2 = vector.load %arg6[%c0_2, %c0_3] : memref<48x384xf32, #tpu.memory_space<vmem>>, vector<8x384xf32>
    tpu.vector_store %arg6[%c0_2, %c0_3], %0 {strides = array<i32>} : memref<48x384xf32, #tpu.memory_space<vmem>>, vector<8x384xf32>,
    %3 = vector.extract_strided_slice %1 {offsets = [0, 0], sizes = [1, 384], strides = [1, 1]} : vector<8x384xf32> to vector<1x384xf32>
    %4 = vector.broadcast %3 : vector<1x384xf32> to vector<8x384xf32>
    %5 = arith.mulf %0, %4 : vector<8x384xf32>
    %c8_4 = arith.constant 8 : index
    %c0_5 = arith.constant 0 : index
    %6 = vector.load %arg6[%c8_4, %c0_5] : memref<48x384xf32, #tpu.memory_space<vmem>>, vector<8x384xf32>
    tpu.vector_store %arg6[%c8_4, %c0_5], %5 {strides = array<i32>} : memref<48x384xf32, #tpu.memory_space<vmem>>, vector<8x384xf32>,
    %7 = vector.extract_strided_slice %1 {offsets = [1, 0], sizes = [1, 384], strides = [1, 1]} : vector<8x384xf32> to vector<1x384xf32>
    %8 = vector.broadcast %7 : vector<1x384xf32> to vector<8x384xf32>
    %9 = arith.mulf %0, %8 : vector<8x384xf32>
    %c16 = arith.constant 16 : index
    %c0_6 = arith.constant 0 : index
    %10 = vector.load %arg6[%c16, %c0_6] : memref<48x384xf32, #tpu.memory_space<vmem>>, vector<8x384xf32>
    tpu.vector_store %arg6[%c16, %c0_6], %9 {strides = array<i32>} : memref<48x384xf32, #tpu.memory_space<vmem>>, vector<8x384xf32>,
    %11 = vector.extract_strided_slice %1 {offsets = [2, 0], sizes = [1, 384], strides = [1, 1]} : vector<8x384xf32> to vector<1x384xf32>
    %12 = vector.broadcast %11 : vector<1x384xf32> to vector<8x384xf32>
    %13 = arith.mulf %0, %12 : vector<8x384xf32>
    %c24 = arith.constant 24 : index
    %c0_7 = arith.constant 0 : index
    %14 = vector.load %arg6[%c24, %c0_7] : memref<48x384xf32, #tpu.memory_space<vmem>>, vector<8x384xf32>
    tpu.vector_store %arg6[%c24, %c0_7], %13 {strides = array<i32>} : memref<48x384xf32, #tpu.memory_space<vmem>>, vector<8x384xf32>,
    %15 = vector.extract_strided_slice %1 {offsets = [3, 0], sizes = [1, 384], strides = [1, 1]} : vector<8x384xf32> to vector<1x384xf32>
    %16 = vector.broadcast %15 : vector<1x384xf32> to vector<8x384xf32>
    %17 = arith.mulf %0, %16 : vector<8x384xf32>
    %c32 = arith.constant 32 : index
    %c0_8 = arith.constant 0 : index
    %18 = vector.load %arg6[%c32, %c0_8] : memref<48x384xf32, #tpu.memory_space<vmem>>, vector<8x384xf32>
    tpu.vector_store %arg6[%c32, %c0_8], %17 {strides = array<i32>} : memref<48x384xf32, #tpu.memory_space<vmem>>, vector<8x384xf32>,
    %c40 = arith.constant 40 : index
    %c0_9 = arith.constant 0 : index
    %19 = vector.load %arg6[%c40, %c0_9] : memref<48x384xf32, #tpu.memory_space<vmem>>, vector<8x384xf32>
    tpu.vector_store %arg6[%c40, %c0_9], %1 {strides = array<i32>} : memref<48x384xf32, #tpu.memory_space<vmem>>, vector<8x384xf32>,
    %c0_10 = arith.constant 0 : index
    %c0_11 = arith.constant 0 : index
    %20 = vector.load %arg3[%c0_10, %c0_11] : memref<32x48xbf16, #tpu.memory_space<vmem>>, vector<32x48xbf16>
    %c0_12 = arith.constant 0 : index
    %c0_13 = arith.constant 0 : index
    %21 = vector.load %arg6[%c0_12, %c0_13] : memref<48x384xf32, #tpu.memory_space<vmem>>, vector<48x384xf32>
    %22 = arith.truncf %21 : vector<48x384xf32> to vector<48x384xbf16>
    %cst = arith.constant dense<0.000000e+00> : vector<32x384xf32>
    %23 = tpu.matmul %20, %22, %cst {dimension_numbers = #tpu.dot_dimension_numbers<[1], [0], [0], [1], [0, 0, 1, 1], [], []>} : vector<32x48xbf16>, vector<48x384xbf16>, vector<32x384xf32> -> vector<32x384xf32>
    %c0_i32 = arith.constant 0 : i32
    %24 = arith.cmpi eq, %arg0, %c0_i32 : i32
    %c0_i32_14 = arith.constant 0 : i32
    %25 = arith.cmpi eq, %arg1, %c0_i32_14 : i32
    %26 = arith.andi %24, %25 : i1
    %27 = arith.extui %26 : i1 to i32
    %c0_i32_15 = arith.constant 0 : i32
    %28 = arith.cmpi ne, %27, %c0_i32_15 : i32
    scf.if %28 {
      %cst_22 = arith.constant 0.000000e+00 : f32
      %40 = vector.broadcast %cst_22 : f32 to vector<32x1xf32>
      %c0_23 = arith.constant 0 : index
      %c0_24 = arith.constant 0 : index
      %41 = vector.load %arg7[%c0_23, %c0_24] : memref<32x1xf32, #tpu.memory_space<vmem>>, vector<32x1xf32>
      tpu.vector_store %arg7[%c0_23, %c0_24], %40 {strides = array<i32>} : memref<32x1xf32, #tpu.memory_space<vmem>>, vector<32x1xf32>,
      %cst_25 = arith.constant 0.000000e+00 : f32
      %42 = vector.broadcast %cst_25 : f32 to vector<32x1xf32>
      %c0_26 = arith.constant 0 : index
      %c0_27 = arith.constant 0 : index
      %43 = vector.load %arg8[%c0_26, %c0_27] : memref<32x1xf32, #tpu.memory_space<vmem>>, vector<32x1xf32>
      tpu.vector_store %arg8[%c0_26, %c0_27], %42 {strides = array<i32>} : memref<32x1xf32, #tpu.memory_space<vmem>>, vector<32x1xf32>,
    } else {
    }
    %c0_i32_16 = arith.constant 0 : i32
    %29 = arith.cmpi eq, %arg0, %c0_i32_16 : i32
    %30 = arith.extui %29 : i1 to i32
    %c0_i32_17 = arith.constant 0 : i32
    %31 = arith.cmpi ne, %30, %c0_i32_17 : i32
    scf.if %31 {
      %c0_22 = arith.constant 0 : index
      %c0_23 = arith.constant 0 : index
      %40 = vector.load %arg7[%c0_22, %c0_23] : memref<32x1xf32, #tpu.memory_space<vmem>>, vector<32x1xf32>
      %cst_24 = arith.constant dense<0.000000e+00> : vector<32xf32>
      %41 = vector.multi_reduction <add>, %23, %cst_24 [1] : vector<32x384xf32> to vector<32xf32>
      %42 = vector.shape_cast %41 : vector<32xf32> to vector<32x1xf32>
      %43 = arith.addf %40, %42 : vector<32x1xf32>
      %c0_25 = arith.constant 0 : index
      %c0_26 = arith.constant 0 : index
      %44 = vector.load %arg7[%c0_25, %c0_26] : memref<32x1xf32, #tpu.memory_space<vmem>>, vector<32x1xf32>
      tpu.vector_store %arg7[%c0_25, %c0_26], %43 {strides = array<i32>} : memref<32x1xf32, #tpu.memory_space<vmem>>, vector<32x1xf32>,
      %c0_27 = arith.constant 0 : index
      %c0_28 = arith.constant 0 : index
      %45 = vector.load %arg8[%c0_27, %c0_28] : memref<32x1xf32, #tpu.memory_space<vmem>>, vector<32x1xf32>
      %46 = arith.mulf %23, %23 : vector<32x384xf32>
      %cst_29 = arith.constant dense<0.000000e+00> : vector<32xf32>
      %47 = vector.multi_reduction <add>, %46, %cst_29 [1] : vector<32x384xf32> to vector<32xf32>
      %48 = vector.shape_cast %47 : vector<32xf32> to vector<32x1xf32>
      %49 = arith.addf %45, %48 : vector<32x1xf32>
      %c0_30 = arith.constant 0 : index
      %c0_31 = arith.constant 0 : index
      %50 = vector.load %arg8[%c0_30, %c0_31] : memref<32x1xf32, #tpu.memory_space<vmem>>, vector<32x1xf32>
      tpu.vector_store %arg8[%c0_30, %c0_31], %49 {strides = array<i32>} : memref<32x1xf32, #tpu.memory_space<vmem>>, vector<32x1xf32>,
      %cst_32 = arith.constant 0.000000e+00 : f32
      %51 = vector.broadcast %cst_32 : f32 to vector<1x384xf32>
      %c0_33 = arith.constant 0 : index
      %c0_34 = arith.constant 0 : index
      %52 = vector.load %arg5[%c0_33, %c0_34] : memref<1x384xf32, #tpu.memory_space<vmem>>, vector<1x384xf32>
      tpu.vector_store %arg5[%c0_33, %c0_34], %51 {strides = array<i32>} : memref<1x384xf32, #tpu.memory_space<vmem>>, vector<1x384xf32>,
    } else {
    }
    %c1_i32 = arith.constant 1 : i32
    %32 = arith.cmpi eq, %arg0, %c1_i32 : i32
    %c0_i32_18 = arith.constant 0 : i32
    %33 = arith.cmpi eq, %arg1, %c0_i32_18 : i32
    %34 = arith.andi %32, %33 : i1
    %35 = arith.extui %34 : i1 to i32
    %c0_i32_19 = arith.constant 0 : i32
    %36 = arith.cmpi ne, %35, %c0_i32_19 : i32
    scf.if %36 {
      %c0_22 = arith.constant 0 : index
      %c0_23 = arith.constant 0 : index
      %40 = vector.load %arg7[%c0_22, %c0_23] : memref<32x1xf32, #tpu.memory_space<vmem>>, vector<32x1xf32>
      %cst_24 = arith.constant 0.00347222225 : f32
      %41 = vector.broadcast %cst_24 : f32 to vector<32x1xf32>
      %42 = arith.mulf %40, %41 : vector<32x1xf32>
      %c0_25 = arith.constant 0 : index
      %c0_26 = arith.constant 0 : index
      %43 = vector.load %arg8[%c0_25, %c0_26] : memref<32x1xf32, #tpu.memory_space<vmem>>, vector<32x1xf32>
      %cst_27 = arith.constant 0.00347222225 : f32
      %44 = vector.broadcast %cst_27 : f32 to vector<32x1xf32>
      %45 = arith.mulf %43, %44 : vector<32x1xf32>
      %46 = arith.mulf %42, %42 : vector<32x1xf32>
      %47 = arith.subf %45, %46 : vector<32x1xf32>
      %cst_28 = arith.constant 0.000000e+00 : f32
      %48 = vector.broadcast %cst_28 : f32 to vector<32x1xf32>
      %49 = arith.maximumf %47, %48 : vector<32x1xf32>
      %c0_29 = arith.constant 0 : index
      %c0_30 = arith.constant 0 : index
      %50 = vector.load %arg9[%c0_29, %c0_30] : memref<32x1xf32, #tpu.memory_space<vmem>>, vector<32x1xf32>
      tpu.vector_store %arg9[%c0_29, %c0_30], %42 {strides = array<i32>} : memref<32x1xf32, #tpu.memory_space<vmem>>, vector<32x1xf32>,
      %cst_31 = arith.constant 9.99999993E-9 : f32
      %51 = vector.broadcast %cst_31 : f32 to vector<32x1xf32>
      %52 = arith.addf %49, %51 : vector<32x1xf32>
      %53 = math.rsqrt %52 : vector<32x1xf32>
      %c0_32 = arith.constant 0 : index
      %c0_33 = arith.constant 0 : index
      %54 = vector.load %arg10[%c0_32, %c0_33] : memref<32x1xf32, #tpu.memory_space<vmem>>, vector<32x1xf32>
      tpu.vector_store %arg10[%c0_32, %c0_33], %53 {strides = array<i32>} : memref<32x1xf32, #tpu.memory_space<vmem>>, vector<32x1xf32>,
    } else {
    }
    %c1_i32_20 = arith.constant 1 : i32
    %37 = arith.cmpi eq, %arg0, %c1_i32_20 : i32
    %38 = arith.extui %37 : i1 to i32
    %c0_i32_21 = arith.constant 0 : i32
    %39 = arith.cmpi ne, %38, %c0_i32_21 : i32
    scf.if %39 {
      %c0_22 = arith.constant 0 : index
      %c0_23 = arith.constant 0 : index
      %40 = vector.load %arg4[%c0_22, %c0_23] : memref<32x4xf32, #tpu.memory_space<vmem>>, vector<32x1xf32>
      %c0_24 = arith.constant 0 : index
      %c1 = arith.constant 1 : index
      %41 = vector.load %arg4[%c0_24, %c1] : memref<32x4xf32, #tpu.memory_space<vmem>>, vector<32x1xf32>
      %c0_25 = arith.constant 0 : index
      %c2 = arith.constant 2 : index
      %42 = vector.load %arg4[%c0_25, %c2] : memref<32x4xf32, #tpu.memory_space<vmem>>, vector<32x1xf32>
      %c0_26 = arith.constant 0 : index
      %c3 = arith.constant 3 : index
      %43 = vector.load %arg4[%c0_26, %c3] : memref<32x4xf32, #tpu.memory_space<vmem>>, vector<1x1xf32>
      %44 = vector.broadcast %40 : vector<32x1xf32> to vector<32x384xf32>
      %45 = arith.addf %23, %44 : vector<32x384xf32>
      %c0_27 = arith.constant 0 : index
      %c0_28 = arith.constant 0 : index
      %46 = vector.load %arg9[%c0_27, %c0_28] : memref<32x1xf32, #tpu.memory_space<vmem>>, vector<32x1xf32>
      %47 = vector.broadcast %46 : vector<32x1xf32> to vector<32x384xf32>
      %48 = arith.subf %23, %47 : vector<32x384xf32>
      %c0_29 = arith.constant 0 : index
      %c0_30 = arith.constant 0 : index
      %49 = vector.load %arg10[%c0_29, %c0_30] : memref<32x1xf32, #tpu.memory_space<vmem>>, vector<32x1xf32>
      %50 = vector.broadcast %49 : vector<32x1xf32> to vector<32x384xf32>
      %51 = arith.mulf %48, %50 : vector<32x384xf32>
      %52 = arith.negf %51 : vector<32x384xf32>
      %53 = math.exp %52 : vector<32x384xf32>
      %cst_31 = arith.constant 1.000000e+00 : f32
      %54 = vector.broadcast %cst_31 : f32 to vector<32x384xf32>
      %55 = arith.addf %54, %53 : vector<32x384xf32>
      %56 = arith.divf %54, %55 : vector<32x384xf32>
      %cst_32 = arith.constant 1.000000e+00 : f32
      %57 = vector.broadcast %cst_32 : f32 to vector<32x384xf32>
      %58 = arith.subf %57, %56 : vector<32x384xf32>
      %59 = vector.broadcast %41 : vector<32x1xf32> to vector<32x384xf32>
      %60 = arith.mulf %59, %58 : vector<32x384xf32>
      %61 = arith.addf %56, %60 : vector<32x384xf32>
      %62 = arith.mulf %61, %45 : vector<32x384xf32>
      %63 = vector.broadcast %42 : vector<32x1xf32> to vector<32x384xf32>
      %64 = arith.mulf %62, %63 : vector<32x384xf32>
      %cst_33 = arith.constant dense<0.000000e+00> : vector<384xf32>
      %65 = vector.multi_reduction <add>, %64, %cst_33 [0] : vector<32x384xf32> to vector<384xf32>
      %66 = vector.shape_cast %65 : vector<384xf32> to vector<1x384xf32>
      %67 = vector.broadcast %43 : vector<1x1xf32> to vector<1x384xf32>
      %68 = arith.addf %66, %67 : vector<1x384xf32>
      %c0_34 = arith.constant 0 : index
      %c0_35 = arith.constant 0 : index
      %69 = vector.load %arg5[%c0_34, %c0_35] : memref<1x384xf32, #tpu.memory_space<vmem>>, vector<1x384xf32>
      tpu.vector_store %arg5[%c0_34, %c0_35], %68 {strides = array<i32>} : memref<1x384xf32, #tpu.memory_space<vmem>>, vector<1x384xf32>,
    } else {
    }
    return
  }
  func.func @transform_0(%arg0: i32, %arg1: i32) -> (i32, i32) {
    %c0_i32 = arith.constant 0 : i32
    %c0_i32_0 = arith.constant 0 : i32
    return %c0_i32, %arg1 : i32, i32
  }
  func.func @transform_1(%arg0: i32, %arg1: i32) -> (i32, i32) {
    %c0_i32 = arith.constant 0 : i32
    %c0_i32_0 = arith.constant 0 : i32
    %c0_i32_1 = arith.constant 0 : i32
    return %c0_i32, %c0_i32_0 : i32, i32
  }
  func.func @transform_2(%arg0: i32, %arg1: i32) -> (i32, i32) {
    %c0_i32 = arith.constant 0 : i32
    %c0_i32_0 = arith.constant 0 : i32
    %c0_i32_1 = arith.constant 0 : i32
    return %c0_i32, %c0_i32_0 : i32, i32
  }
  func.func @transform_3(%arg0: i32, %arg1: i32) -> (i32, i32) {
    %c0_i32 = arith.constant 0 : i32
    %c0_i32_0 = arith.constant 0 : i32
    return %c0_i32, %arg1 : i32, i32
  }
}

</mosaic_0001>

<llo_original>
// kernel: tpu_custom_call.1
$region0: #{tpu_custom_call.1}
  #allocation0 [shape = 'u32[]', space=smem, size = 0x4, offset = 0x4, fixed_abs, tag = 'smem constant byte address 0x4 - core index']
  #allocation1 [shape = 'u32[144,128]{1,0:T(1,128)}', space=vmem, size = 0x12000, scoped, tag = 'internal scratch']
  #allocation2 [shape = 'f32[48,384]{1,0:T(8,128)}', space=vmem, size = 0x12000, scoped, tag = 'scratch operand']
  #allocation3 [shape = 'f32[32,1]{1,0:T(8,128)}', space=vmem, size = 0x4000, scoped, tag = 'scratch operand']
  #allocation4 [shape = 'f32[32,1]{1,0:T(8,128)}', space=vmem, size = 0x4000, scoped, tag = 'scratch operand']
  #allocation5 [shape = 'f32[32,1]{1,0:T(8,128)}', space=vmem, size = 0x4000, scoped, tag = 'scratch operand']
  #allocation6 [shape = 'f32[32,1]{1,0:T(8,128)}', space=vmem, size = 0x4000, scoped, tag = 'scratch operand']
  %s0 = inlined_call_operand.hbm [shape: f32[16,384], index: 0, kind: input, shape index: {}]
  %s1 = inlined_call_operand.vmem [shape: bf16[32,48], index: 1, kind: input, shape index: {}]
  %s2 = inlined_call_operand.vmem [shape: f32[32,4], index: 2, kind: input, shape index: {}]
  %s3 = inlined_call_operand.hbm [shape: f32[1,384], index: 3, kind: output, shape index: {}]
  %s4 = sld [smem:[#allocation0]]
  $region65: #{tpu_custom_call.1} parent=0
    _
  %s6 = ssub.s32 1, %s4
  %s7 = scalar_select 0, %s6, %s4
  $region1: #{tpu_custom_call.1} parent=0
    #allocation7 [shape = 'u8[24576]{0}', space=vmem, size = 0x6000, scoped, tag = 'input window, operand 0, single buffered']
    #allocation8 [shape = 's32[2]{0}', space=sflag, size = 0x8, scoped, tag = 'scoped memory for tpu_custom_call.1']
    #allocation9 [shape = 's32[2]{0}', space=sflag, size = 0x8, scoped, tag = 'scoped memory for tpu_custom_call.1']
    #allocation10 [shape = 'u8[1536]{0}', space=vmem, size = 0x800, scoped, tag = 'output window, operand 0, single buffered']
    %8 = vsyncpa [#allocation8], 0
    %9 = vsyncpa [#allocation9], 0
    loop: start=0, step=1, limit=4
    $region2: #{tpu_custom_call.1} parent=1 // loop_pre_header
      _
    $region3: #{tpu_custom_call.1} parent=1 // loop_header
      %s11 = sphi 0, %s15
      %p12 = scmp.ge.s32.totalorder %s11, 4
      %s18 = sphi 0, %s30
      %s19 = sphi 0, %s26
      %s20 = sphi 0, %s18
      %s21 = sphi 0, %s19
      %s22 = sphi 0, %s20
      %s23 = sphi 0, %s21
      %s33 = sphi 0, %s35
      %s36 = sphi 0, %s33
      %s37 = sphi 0, %s36
      %s53 = sphi 0, %s37
      %s57 = sphi 0, %s57
      %s59 = sphi 0, %s57
      %s60 = sphi 0, %s59
      %s74 = sphi 0, %s60
      %s78 = sphi 0, %s78
      %s80 = sphi 0, %s78
      %s81 = sphi 0, %s80
      %s95 = sphi 0, %s81
      %s101 = sphi 0, %s103
      %s104 = sphi 0, %s101
      %s105 = sphi 0, %s104
      %s121 = sphi 0, %s105
    $region4: #{tpu_custom_call.1} parent=1 // loop_header_branch
      %14 = sbr.rel (%p12) target = $region8
    $region5: #{tpu_custom_call.1} parent=1 // loop_body
      %s16 = ssub.s32 %s11, 1
      %s17 = ssub.s32 %s11, 2
      %s24 = sadd.s32 1, %s19
      %p25 = scmp.ge.s32.totalorder %s24, 1
      %s26 = scalar_select %p25, 0, %s24
      %s27 = sadd.s32 1, %s18
      %s28 = scalar_select %p25, %s27, %s18
      %p29 = scmp.ge.s32.totalorder %s28, 2
      %s30 = scalar_select %p29, 0, %s28
      %s31 = ssub.s32 %s19, %s26
      %p32 = scmp.eq.s32.totalorder %s31, 0
      %s34 = sadd.s32 %s33, 1
      %s35 = scalar_select %p32, %s33, %s34
      %p38 = pneg %p32
      %p39 = scmp.eq.s32.totalorder %s11, 1
      %p40 = por %p38, %p39
      %p41 = scmp.ne.s32.totalorder %s33, %s36
      %p42 = scmp.eq.s32.totalorder %s11, 0
      %p43 = por %p41, %p42
      %p44 = scmp.ne.s32.totalorder %s33, %s36
      %p45 = scmp.eq.s32.totalorder %s16, 1
      %p46 = por %p44, %p45
      %p47 = scmp.ne.s32.totalorder %s36, %s37
      %p48 = scmp.eq.s32.totalorder %s16, 0
      %p49 = por %p47, %p48
      %p50 = scmp.ne.s32.totalorder %s36, %s37
      %p51 = scmp.eq.s32.totalorder %s17, 1
      %p52 = por %p50, %p51
      %p54 = scmp.ne.s32.totalorder %s37, %s53
      %p55 = scmp.eq.s32.totalorder %s17, 0
      %p56 = por %p54, %p55
      %s58 = sadd.s32 %s57, 1
      %p61 = scmp.eq.s32.totalorder %s11, 1
      %p62 = scmp.ne.s32.totalorder %s57, %s59
      %p63 = scmp.eq.s32.totalorder %s11, 0
      %p64 = por %p62, %p63
      %p65 = scmp.ne.s32.totalorder %s57, %s59
      %p66 = scmp.eq.s32.totalorder %s16, 1
      %p67 = por %p65, %p66
      %p68 = scmp.ne.s32.totalorder %s59, %s60
      %p69 = scmp.eq.s32.totalorder %s16, 0
      %p70 = por %p68, %p69
      %p71 = scmp.ne.s32.totalorder %s59, %s60
      %p72 = scmp.eq.s32.totalorder %s17, 1
      %p73 = por %p71, %p72
      %p75 = scmp.ne.s32.totalorder %s60, %s74
      %p76 = scmp.eq.s32.totalorder %s17, 0
      %p77 = por %p75, %p76
      %s79 = sadd.s32 %s78, 1
      %p82 = scmp.eq.s32.totalorder %s11, 1
      %p83 = scmp.ne.s32.totalorder %s78, %s80
      %p84 = scmp.eq.s32.totalorder %s11, 0
      %p85 = por %p83, %p84
      %p86 = scmp.ne.s32.totalorder %s78, %s80
      %p87 = scmp.eq.s32.totalorder %s16, 1
      %p88 = por %p86, %p87
      %p89 = scmp.ne.s32.totalorder %s80, %s81
      %p90 = scmp.eq.s32.totalorder %s16, 0
      %p91 = por %p89, %p90
      %p92 = scmp.ne.s32.totalorder %s80, %s81
      %p93 = scmp.eq.s32.totalorder %s17, 1
      %p94 = por %p92, %p93
      %p96 = scmp.ne.s32.totalorder %s81, %s95
      %p97 = scmp.eq.s32.totalorder %s17, 0
      %p98 = por %p96, %p97
      %s99 = ssub.s32 %s19, %s26
      %p100 = scmp.eq.s32.totalorder %s99, 0
      %s102 = sadd.s32 %s101, 1
      %s103 = scalar_select %p100, %s101, %s102
      %p106 = pneg %p100
      %p107 = scmp.eq.s32.totalorder %s11, 1
      %p108 = por %p106, %p107
      %p109 = scmp.ne.s32.totalorder %s101, %s104
      %p110 = scmp.eq.s32.totalorder %s11, 0
      %p111 = por %p109, %p110
      %p112 = scmp.ne.s32.totalorder %s101, %s104
      %p113 = scmp.eq.s32.totalorder %s16, 1
      %p114 = por %p112, %p113
      %p115 = scmp.ne.s32.totalorder %s104, %s105
      %p116 = scmp.eq.s32.totalorder %s16, 0
      %p117 = por %p115, %p116
      %p118 = scmp.ne.s32.totalorder %s104, %s105
      %p119 = scmp.eq.s32.totalorder %s17, 1
      %p120 = por %p118, %p119
      %p122 = scmp.ne.s32.totalorder %s105, %s121
      %p123 = scmp.eq.s32.totalorder %s17, 0
      %p124 = por %p122, %p123
      %p125 = scmp.le.s32.totalorder 1, %s11
      %p126 = scmp.lt.s32.totalorder %s11, 3
      %p127 = pnand %p125, %p126
      %p128 = pneg %p127
      // Predicated region
      $region9: #{tpu_custom_call.1} parent=5 // pred_check
        _
      $region10: #{tpu_custom_call.1} parent=5 // pred_check_branch
        %130 = sbr.rel (%p127) target = $region12
      $region11: #{tpu_custom_call.1} parent=5 // pred_region
        %s131 = ssub.s32 %s11, 1
        // Predicated region
        $region13: #{tpu_custom_call.1} parent=11 // pred_check
          %p132 = pneg %p49
        $region14: #{tpu_custom_call.1} parent=11 // pred_check_branch
          %134 = sbr.rel (%p132) target = $region16
        $region15: #{tpu_custom_call.1} parent=11 // pred_region
          %s135 = smul.u32 3, %s21
          %s137 = ssub.s32 768, 768
          %138 = vsyncadd [#allocation8], %s137
          %s139 = smul.addr %s135, 128
          %s140 = scalar_lea.hbm %s0, %s139
          %s141 = sshll.u32 [#allocation7], 4
          %s142 = int_to_ptr.vmem [resolvable:$true] %s141
          %147 = dma.hbm_to_vmem [thread:$0]  %s140, 768, %s142, [#allocation8], 384, 384, 24
        $region16: #{tpu_custom_call.1} parent=11 // pred_fallthru
          _
        // Predicated region
        $region17: #{tpu_custom_call.1} parent=11 // pred_check
          %p148 = pneg %p70
        $region18: #{tpu_custom_call.1} parent=11 // pred_check_branch
          %150 = sbr.rel (%p148) target = $region20
        $region19: #{tpu_custom_call.1} parent=11 // pred_region
          _
        $region20: #{tpu_custom_call.1} parent=11 // pred_fallthru
          _
        // Predicated region
        $region21: #{tpu_custom_call.1} parent=11 // pred_check
          %p151 = pneg %p91
        $region22: #{tpu_custom_call.1} parent=11 // pred_check_branch
          %153 = sbr.rel (%p151) target = $region24
        $region23: #{tpu_custom_call.1} parent=11 // pred_region
          _
        $region24: #{tpu_custom_call.1} parent=11 // pred_fallthru
          _
      $region12: #{tpu_custom_call.1} parent=5 // pred_fallthru
        _
      %p154 = scmp.lt.s32.totalorder %s11, 2
      // Predicated region
      $region25: #{tpu_custom_call.1} parent=5 // pred_check
        %p155 = pneg %p154
      $region26: #{tpu_custom_call.1} parent=5 // pred_check_branch
        %157 = sbr.rel (%p155) target = $region28
      $region27: #{tpu_custom_call.1} parent=5 // pred_region
        _
      $region28: #{tpu_custom_call.1} parent=5 // pred_fallthru
        _
      %p158 = scmp.le.s32.totalorder 1, %s11
      %p159 = scmp.lt.s32.totalorder %s11, 3
      %p160 = pnand %p158, %p159
      %p161 = pneg %p160
      // Predicated region
      $region29: #{tpu_custom_call.1} parent=5 // pred_check
        _
      $region30: #{tpu_custom_call.1} parent=5 // pred_check_branch
        %163 = sbr.rel (%p160) target = $region32
      $region31: #{tpu_custom_call.1} parent=5 // pred_region
        %s164 = ssub.s32 %s11, 1
        // Predicated region
        $region33: #{tpu_custom_call.1} parent=31 // pred_check
          %p165 = pneg %p49
        $region34: #{tpu_custom_call.1} parent=31 // pred_check_branch
          %167 = sbr.rel (%p165) target = $region36
        $region35: #{tpu_custom_call.1} parent=31 // pred_region
          %168 = dma.done [#allocation8], 768
        $region36: #{tpu_custom_call.1} parent=31 // pred_fallthru
          _
        %p169 = pneg %p49
        %p170 = pneg %p46
        %p171 = pneg %p70
        %p172 = pneg %p67
        %p173 = pneg %p91
        %p174 = pneg %p88
        %p175 = pneg %p117
        %p176 = pneg %p114
        %s177 = smul.u32 3, %s21
        %s178 = smul.u32 3, %s21
        %v180 = vld [vmem:[#allocation7] sm:$0xff]
        %v181 = vld [vmem:[#allocation7 + $0x8] sm:$0xff]
        %v182 = vld [vmem:[#allocation7 + $0x10] sm:$0xff]
        %v183 = vld [vmem:[#allocation7 + $0x18] sm:$0xff]
        %v184 = vld [vmem:[#allocation7 + $0x20] sm:$0xff]
        %v185 = vld [vmem:[#allocation7 + $0x28] sm:$0xff]
        %186 = vst [vmem:[#allocation2] sm:$0xff] %v180
        %187 = vst [vmem:[#allocation2 + $0x8] sm:$0xff] %v181
        %188 = vst [vmem:[#allocation2 + $0x10] sm:$0xff] %v182
        %v189 = vlaneseq
        %v190 = vshrl.u32 %v189, 7
        %v191 = vsub.s32 0, %v190
        %v192 = vrot.slane %v183, %v191
        %v193 = vlaneseq
        %v194 = vshrl.u32 %v193, 7
        %v195 = vsub.s32 0, %v194
        %v196 = vrot.slane %v184, %v195
        %v197 = vlaneseq
        %v198 = vshrl.u32 %v197, 7
        %v199 = vsub.s32 0, %v198
        %v200 = vrot.slane %v185, %v199
        %v201 = vmul.f32 %v180, %v192
        %v202 = vmul.f32 %v181, %v196
        %v203 = vmul.f32 %v182, %v200
        %204 = vst [vmem:[#allocation2 + $0x18] sm:$0xff] %v201
        %205 = vst [vmem:[#allocation2 + $0x20] sm:$0xff] %v202
        %206 = vst [vmem:[#allocation2 + $0x28] sm:$0xff] %v203
        %v207 = vlaneseq
        %v208 = vshrl.u32 %v207, 7
        %v209 = vsub.s32 1, %v208
        %v210 = vrot.slane %v183, %v209
        %v211 = vlaneseq
        %v212 = vshrl.u32 %v211, 7
        %v213 = vsub.s32 1, %v212
        %v214 = vrot.slane %v184, %v213
        %v215 = vlaneseq
        %v216 = vshrl.u32 %v215, 7
        %v217 = vsub.s32 1, %v216
        %v218 = vrot.slane %v185, %v217
        %v219 = vmul.f32 %v180, %v210
        %v220 = vmul.f32 %v181, %v214
        %v221 = vmul.f32 %v182, %v218
        %222 = vst [vmem:[#allocation2 + $0x30] sm:$0xff] %v219
        %223 = vst [vmem:[#allocation2 + $0x38] sm:$0xff] %v220
        %224 = vst [vmem:[#allocation2 + $0x40] sm:$0xff] %v221
        %v225 = vlaneseq
        %v226 = vshrl.u32 %v225, 7
        %v227 = vsub.s32 2, %v226
        %v228 = vrot.slane %v183, %v227
        %v229 = vlaneseq
        %v230 = vshrl.u32 %v229, 7
        %v231 = vsub.s32 2, %v230
        %v232 = vrot.slane %v184, %v231
        %v233 = vlaneseq
        %v234 = vshrl.u32 %v233, 7
        %v235 = vsub.s32 2, %v234
        %v236 = vrot.slane %v185, %v235
        %v237 = vmul.f32 %v180, %v228
        %v238 = vmul.f32 %v181, %v232
        %v239 = vmul.f32 %v182, %v236
        %240 = vst [vmem:[#allocation2 + $0x48] sm:$0xff] %v237
        %241 = vst [vmem:[#allocation2 + $0x50] sm:$0xff] %v238
        %242 = vst [vmem:[#allocation2 + $0x58] sm:$0xff] %v239
        %v243 = vlaneseq
        %v244 = vshrl.u32 %v243, 7
        %v245 = vsub.s32 3, %v244
        %v246 = vrot.slane %v183, %v245
        %v247 = vlaneseq
        %v248 = vshrl.u32 %v247, 7
        %v249 = vsub.s32 3, %v248
        %v250 = vrot.slane %v184, %v249
        %v251 = vlaneseq
        %v252 = vshrl.u32 %v251, 7
        %v253 = vsub.s32 3, %v252
        %v254 = vrot.slane %v185, %v253
        %v255 = vmul.f32 %v180, %v246
        %v256 = vmul.f32 %v181, %v250
        %v257 = vmul.f32 %v182, %v254
        %258 = vst [vmem:[#allocation2 + $0x60] sm:$0xff] %v255
        %259 = vst [vmem:[#allocation2 + $0x68] sm:$0xff] %v256
        %260 = vst [vmem:[#allocation2 + $0x70] sm:$0xff] %v257
        %261 = vst [vmem:[#allocation2 + $0x78] sm:$0xff] %v183
        %262 = vst [vmem:[#allocation2 + $0x80] sm:$0xff] %v184
        %263 = vst [vmem:[#allocation2 + $0x88] sm:$0xff] %v185
        %v264 = vld [vmem:[%s1] sm:$0xf]
        %v265 = vld [vmem:[%s1 + $0x4] sm:$0xf]
        %v266 = vld [vmem:[%s1 + $0x8] sm:$0xf]
        %v267 = vld [vmem:[%s1 + $0xc] sm:$0xf]
        %v268 = vld [vmem:[#allocation2] sm:$0xff]
        %v269 = vld [vmem:[#allocation2 + $0x8] sm:$0xff]
        %v270 = vld [vmem:[#allocation2 + $0x10] sm:$0xff]
        %v271 = vld [vmem:[#allocation2 + $0x18] sm:$0xff]
        %v272 = vld [vmem:[#allocation2 + $0x20] sm:$0xff]
        %v273 = vld [vmem:[#allocation2 + $0x28] sm:$0xff]
        %v274 = vld [vmem:[#allocation2 + $0x30] sm:$0xff]
        %v275 = vld [vmem:[#allocation2 + $0x38] sm:$0xff]
        %v276 = vld [vmem:[#allocation2 + $0x40] sm:$0xff]
        %v277 = vld [vmem:[#allocation2 + $0x48] sm:$0xff]
        %v278 = vld [vmem:[#allocation2 + $0x50] sm:$0xff]
        %v279 = vld [vmem:[#allocation2 + $0x58] sm:$0xff]
        %v280 = vld [vmem:[#allocation2 + $0x60] sm:$0xff]
        %v281 = vld [vmem:[#allocation2 + $0x68] sm:$0xff]
        %v282 = vld [vmem:[#allocation2 + $0x70] sm:$0xff]
        %v283 = vld [vmem:[#allocation2 + $0x78] sm:$0xff]
        %v284 = vld [vmem:[#allocation2 + $0x80] sm:$0xff]
        %v285 = vld [vmem:[#allocation2 + $0x88] sm:$0xff]
        %v286 = vpack.c.bf16 %v271, %v268
        %v287 = vpack.c.bf16 %v272, %v269
        %v288 = vpack.c.bf16 %v273, %v270
        %v289 = vpack.c.bf16 %v277, %v274
        %v290 = vpack.c.bf16 %v278, %v275
        %v291 = vpack.c.bf16 %v279, %v276
        %v292 = vpack.c.bf16 %v283, %v280
        %v293 = vpack.c.bf16 %v284, %v281
        %v294 = vpack.c.bf16 %v285, %v282
        %v299 = vunpack.c.l.b16 %v264
        %v300 = vunpack.c.l.b16 %v265
        %v301 = vunpack.c.l.b16 %v266
        %v302 = vunpack.c.l.b16 %v267
        %v303 = vpack.c.b16 %v300, %v299
        %v304 = vpack.c.b16 %v302, %v301
        %vm305 = vcmask 392192
        %v307 = vsel %vm305, %v303, 0
        %v310 = vsel %vm305, %v304, 0
        %312 = vmatprep.subr.bf16.mxu0 %v287
        %313 = vmatpush1.bf16.msra.mxu0 %v286
        %314 = vmatprep.subr.bf16.mxu0 %v290
        %315 = vmatpush1.bf16.msra.mxu0 %v289
        %316 = vmatprep.subr.bf16.mxu0 %v293
        %317 = vmatpush1.bf16.msra.mxu0 %v292
        %318 = vmatprep.subr.bf16.mxu0 0
        %319 = vmatpush1.bf16.msra.mxu0 0
        %320 = vmatprep.subr.bf16.mxu0 0
        %321 = vmatpush1.bf16.msra.mxu0 0
        %322 = vmatprep.subr.bf16.mxu0 0
        %323 = vmatpush1.bf16.msra.mxu0 0
        %324 = vmatprep.subr.bf16.mxu0 0
        %325 = vmatpush1.bf16.msra.mxu0 0
        %326 = vmatprep.subr.bf16.mxu0 0
        %327 = vmatpush1.bf16.msra.mxu0 0
        %328 = vmatprep.subr.bf16.mxu0 0
        %329 = vmatpush1.bf16.msra.mxu0 0
        %330 = vmatprep.subr.bf16.mxu0 0
        %331 = vmatpush1.bf16.msra.mxu0 0
        %332 = vmatprep.subr.bf16.mxu0 0
        %333 = vmatpush1.bf16.msra.mxu0 0
        %334 = vmatprep.subr.bf16.mxu0 0
        %335 = vmatpush1.bf16.msra.mxu0 0
        %336 = vmatprep.subr.bf16.mxu0 0
        %337 = vmatpush1.bf16.msra.mxu0 0
        %338 = vmatprep.subr.bf16.mxu0 0
        %339 = vmatpush1.bf16.msra.mxu0 0
        %340 = vmatprep.subr.bf16.mxu0 0
        %341 = vmatpush1.bf16.msra.mxu0 0
        %342 = vmatprep.subr.bf16.mxu0 0
        %343 = vmatpush1.bf16.msra.mxu0 0
        %344 = vmatprep.mubr.bf16.mxu0 0
        %345 = vmatmul.mubr.bf16.gmra.mrb[0].mxu0 %v307
        %v346 = vpop.f32.mrb[0].mxu0
        %v347 = vadd.f32 0.0, %v346
        %v348 = vpop.f32.mrb[0].mxu0
        %v349 = vadd.f32 0.0, %v348
        %v350 = vpop.f32.mrb[0].mxu0
        %v351 = vadd.f32 0.0, %v350
        %v352 = vpop.f32.mrb[0].mxu0
        %v353 = vadd.f32 0.0, %v352
        %354 = vmatprep.mubr.bf16.mxu0 0
        %355 = vmatmul.mubr.bf16.gmra.mrb[0].mxu0 %v310
        %v356 = vpop.f32.mrb[0].mxu0
        %v357 = vadd.f32 0.0, %v356
        %v358 = vpop.f32.mrb[0].mxu0
        %v359 = vadd.f32 0.0, %v358
        %v360 = vpop.f32.mrb[0].mxu0
        %v361 = vadd.f32 0.0, %v360
        %v362 = vpop.f32.mrb[0].mxu0
        %v363 = vadd.f32 0.0, %v362
        %364 = vdwg.mxu0
        %365 = vmatprep.subr.bf16.mxu0 0
        %366 = vmatpush1.bf16.msra.mxu0 %v288
        %367 = vmatprep.subr.bf16.mxu0 0
        %368 = vmatpush1.bf16.msra.mxu0 %v291
        %369 = vmatprep.subr.bf16.mxu0 0
        %370 = vmatpush1.bf16.msra.mxu0 %v294
        %371 = vmatprep.subr.bf16.mxu0 0
        %372 = vmatpush1.bf16.msra.mxu0 0
        %373 = vmatprep.subr.bf16.mxu0 0
        %374 = vmatpush1.bf16.msra.mxu0 0
        %375 = vmatprep.subr.bf16.mxu0 0
        %376 = vmatpush1.bf16.msra.mxu0 0
        %377 = vmatprep.subr.bf16.mxu0 0
        %378 = vmatpush1.bf16.msra.mxu0 0
        %379 = vmatprep.subr.bf16.mxu0 0
        %380 = vmatpush1.bf16.msra.mxu0 0
        %381 = vmatprep.subr.bf16.mxu0 0
        %382 = vmatpush1.bf16.msra.mxu0 0
        %383 = vmatprep.subr.bf16.mxu0 0
        %384 = vmatpush1.bf16.msra.mxu0 0
        %385 = vmatprep.subr.bf16.mxu0 0
        %386 = vmatpush1.bf16.msra.mxu0 0
        %387 = vmatprep.subr.bf16.mxu0 0
        %388 = vmatpush1.bf16.msra.mxu0 0
        %389 = vmatprep.subr.bf16.mxu0 0
        %390 = vmatpush1.bf16.msra.mxu0 0
        %391 = vmatprep.subr.bf16.mxu0 0
        %392 = vmatpush1.bf16.msra.mxu0 0
        %393 = vmatprep.subr.bf16.mxu0 0
        %394 = vmatpush1.bf16.msra.mxu0 0
        %395 = vmatprep.subr.bf16.mxu0 0
        %396 = vmatpush1.bf16.msra.mxu0 0
        %397 = vmatprep.mubr.bf16.mxu0 0
        %398 = vmatmul.mubr.bf16.gmra.mrb[0].mxu0 %v307
        %v399 = vpop.f32.mrb[0].mxu0
        %v400 = vadd.f32 0.0, %v399
        %v401 = vpop.f32.mrb[0].mxu0
        %v402 = vpop.f32.mrb[0].mxu0
        %v403 = vadd.f32 0.0, %v402
        %v404 = vpop.f32.mrb[0].mxu0
        %405 = vmatprep.mubr.bf16.mxu0 0
        %406 = vmatmul.mubr.bf16.gmra.mrb[0].mxu0 %v310
        %v407 = vpop.f32.mrb[0].mxu0
        %v408 = vadd.f32 0.0, %v407
        %v409 = vpop.f32.mrb[0].mxu0
        %v410 = vpop.f32.mrb[0].mxu0
        %v411 = vadd.f32 0.0, %v410
        %v412 = vpop.f32.mrb[0].mxu0
        %413 = vdwg.mxu0
        %p414 = scmp.eq.s32.totalorder %s20, 0
        %p415 = scmp.eq.s32.totalorder %s21, 0
        %p416 = pnand %p414, %p415
        %p417 = pneg %p416
        // Predicated region
        $region37: #{tpu_custom_call.1} parent=31 // pred_check
          _
        $region38: #{tpu_custom_call.1} parent=31 // pred_check_branch
          %419 = sbr.rel (%p416) target = $region40
        $region39: #{tpu_custom_call.1} parent=31 // pred_region
          %vm420 = vcmask 7168
          %421 = vst.msk [vmem:[#allocation3] sm:$0xff] %vm420, 0.0
          %422 = vst.msk [vmem:[#allocation3 + $0x8] sm:$0xff] %vm420, 0.0
          %423 = vst.msk [vmem:[#allocation3 + $0x10] sm:$0xff] %vm420, 0.0
          %424 = vst.msk [vmem:[#allocation3 + $0x18] sm:$0xff] %vm420, 0.0
          %425 = vst.msk [vmem:[#allocation4] sm:$0xff] %vm420, 0.0
          %426 = vst.msk [vmem:[#allocation4 + $0x8] sm:$0xff] %vm420, 0.0
          %427 = vst.msk [vmem:[#allocation4 + $0x10] sm:$0xff] %vm420, 0.0
          %428 = vst.msk [vmem:[#allocation4 + $0x18] sm:$0xff] %vm420, 0.0
        $region40: #{tpu_custom_call.1} parent=31 // pred_fallthru
          _
        // Predicated region
        $region41: #{tpu_custom_call.1} parent=31 // pred_check
          %p429 = pneg %p414
        $region42: #{tpu_custom_call.1} parent=31 // pred_check_branch
          %431 = sbr.rel (%p429) target = $region44
        $region43: #{tpu_custom_call.1} parent=31 // pred_region
          %v432 = vld [vmem:[#allocation3] sm:$0xff]
          %v433 = vld [vmem:[#allocation3 + $0x8] sm:$0xff]
          %v434 = vld [vmem:[#allocation3 + $0x10] sm:$0xff]
          %v435 = vld [vmem:[#allocation3 + $0x18] sm:$0xff]
          %v436 = vadd.f32 %v347, %v349
          %v437 = vadd.f32 %v436, %v400
          %438 = vadd.xlane.f32.xlu0 %v437
          %v439 = vpop.xlane.xlu0 %438
          %v440 = vadd.f32 %v351, %v353
          %v441 = vadd.f32 %v440, %v403
          %442 = vadd.xlane.f32.xlu0 %v441
          %v443 = vpop.xlane.xlu0 %442
          %v444 = vadd.f32 %v357, %v359
          %v445 = vadd.f32 %v444, %v408
          %446 = vadd.xlane.f32.xlu0 %v445
          %v447 = vpop.xlane.xlu0 %446
          %v448 = vadd.f32 %v361, %v363
          %v449 = vadd.f32 %v448, %v411
          %450 = vadd.xlane.f32.xlu0 %v449
          %v451 = vpop.xlane.xlu0 %450
          %v452 = vadd.f32 %v432, %v439
          %v453 = vadd.f32 %v433, %v443
          %v454 = vadd.f32 %v434, %v447
          %v455 = vadd.f32 %v435, %v451
          %vm456 = vcmask 7168
          %457 = vst.msk [vmem:[#allocation3] sm:$0xff] %vm456, %v452
          %458 = vst.msk [vmem:[#allocation3 + $0x8] sm:$0xff] %vm456, %v453
          %459 = vst.msk [vmem:[#allocation3 + $0x10] sm:$0xff] %vm456, %v454
          %460 = vst.msk [vmem:[#allocation3 + $0x18] sm:$0xff] %vm456, %v455
          %v461 = vld [vmem:[#allocation4] sm:$0xff]
          %v462 = vld [vmem:[#allocation4 + $0x8] sm:$0xff]
          %v463 = vld [vmem:[#allocation4 + $0x10] sm:$0xff]
          %v464 = vld [vmem:[#allocation4 + $0x18] sm:$0xff]
          %v465 = vmul.f32 %v347, %v347
          %v466 = vmul.f32 %v349, %v349
          %v467 = vmul.f32 %v400, %v400
          %v468 = vmul.f32 %v351, %v351
          %v469 = vmul.f32 %v353, %v353
          %v470 = vmul.f32 %v403, %v403
          %v471 = vmul.f32 %v357, %v357
          %v472 = vmul.f32 %v359, %v359
          %v473 = vmul.f32 %v408, %v408
          %v474 = vmul.f32 %v361, %v361
          %v475 = vmul.f32 %v363, %v363
          %v476 = vmul.f32 %v411, %v411
          %v477 = vadd.f32 %v465, %v466
          %v478 = vadd.f32 %v477, %v467
          %479 = vadd.xlane.f32.xlu0 %v478
          %v480 = vpop.xlane.xlu0 %479
          %v481 = vadd.f32 %v468, %v469
          %v482 = vadd.f32 %v481, %v470
          %483 = vadd.xlane.f32.xlu0 %v482
          %v484 = vpop.xlane.xlu0 %483
          %v485 = vadd.f32 %v471, %v472
          %v486 = vadd.f32 %v485, %v473
          %487 = vadd.xlane.f32.xlu0 %v486
          %v488 = vpop.xlane.xlu0 %487
          %v489 = vadd.f32 %v474, %v475
          %v490 = vadd.f32 %v489, %v476
          %491 = vadd.xlane.f32.xlu0 %v490
          %v492 = vpop.xlane.xlu0 %491
          %v493 = vadd.f32 %v461, %v480
          %v494 = vadd.f32 %v462, %v484
          %v495 = vadd.f32 %v463, %v488
          %v496 = vadd.f32 %v464, %v492
          %497 = vst.msk [vmem:[#allocation4] sm:$0xff] %vm456, %v493
          %498 = vst.msk [vmem:[#allocation4 + $0x8] sm:$0xff] %vm456, %v494
          %499 = vst.msk [vmem:[#allocation4 + $0x10] sm:$0xff] %vm456, %v495
          %500 = vst.msk [vmem:[#allocation4 + $0x18] sm:$0xff] %vm456, %v496
          %v501 = vlaneseq
          %vm502 = vcmp.ge.s32.totalorder %v501, 0
          %vm503 = vcmp.lt.s32.totalorder %v501, 384
          %vm504 = vmand %vm502, %vm503
          %505 = vst.msk [vmem:[#allocation10] sm:$0x7] %vm504, 0.0
        $region44: #{tpu_custom_call.1} parent=31 // pred_fallthru
          _
        %p506 = scmp.eq.s32.totalorder %s20, 1
        %p507 = pnand %p506, %p415
        %p508 = pneg %p507
        // Predicated region
        $region45: #{tpu_custom_call.1} parent=31 // pred_check
          _
        $region46: #{tpu_custom_call.1} parent=31 // pred_check_branch
          %510 = sbr.rel (%p507) target = $region48
        $region47: #{tpu_custom_call.1} parent=31 // pred_region
          %v511 = vld [vmem:[#allocation3] sm:$0xff]
          %v512 = vld [vmem:[#allocation3 + $0x8] sm:$0xff]
          %v513 = vld [vmem:[#allocation3 + $0x10] sm:$0xff]
          %v514 = vld [vmem:[#allocation3 + $0x18] sm:$0xff]
          %v515 = vmul.f32 %v511, 0.0034722222
          %v516 = vmul.f32 %v512, 0.0034722222
          %v517 = vmul.f32 %v513, 0.0034722222
          %v518 = vmul.f32 %v514, 0.0034722222
          %v519 = vld [vmem:[#allocation4] sm:$0xff]
          %v520 = vld [vmem:[#allocation4 + $0x8] sm:$0xff]
          %v521 = vld [vmem:[#allocation4 + $0x10] sm:$0xff]
          %v522 = vld [vmem:[#allocation4 + $0x18] sm:$0xff]
          %v523 = vmul.f32 %v519, 0.0034722222
          %v524 = vmul.f32 %v520, 0.0034722222
          %v525 = vmul.f32 %v521, 0.0034722222
          %v526 = vmul.f32 %v522, 0.0034722222
          %v527 = vmul.f32 %v515, %v515
          %v528 = vmul.f32 %v516, %v516
          %v529 = vmul.f32 %v517, %v517
          %v530 = vmul.f32 %v518, %v518
          %v531 = vsub.f32 %v523, %v527
          %v532 = vsub.f32 %v524, %v528
          %v533 = vsub.f32 %v525, %v529
          %v534 = vsub.f32 %v526, %v530
          %v535 = vmax.f32 %v531, 0.0
          %v536 = vmax.f32 %v532, 0.0
          %v537 = vmax.f32 %v533, 0.0
          %v538 = vmax.f32 %v534, 0.0
          %vm539 = vcmask 7168
          %540 = vst.msk [vmem:[#allocation5] sm:$0xff] %vm539, %v515
          %541 = vst.msk [vmem:[#allocation5 + $0x8] sm:$0xff] %vm539, %v516
          %542 = vst.msk [vmem:[#allocation5 + $0x10] sm:$0xff] %vm539, %v517
          %543 = vst.msk [vmem:[#allocation5 + $0x18] sm:$0xff] %vm539, %v518
          %v544 = vadd.f32 %v535, 1e-08
          %v545 = vadd.f32 %v536, 1e-08
          %v546 = vadd.f32 %v537, 1e-08
          %v547 = vadd.f32 %v538, 1e-08
          %v548 = vrsqrt.pop %v544
          %v549 = vrsqrt.pop %v545
          %v550 = vrsqrt.pop %v546
          %v551 = vrsqrt.pop %v547
          %552 = vst.msk [vmem:[#allocation6] sm:$0xff] %vm539, %v548
          %553 = vst.msk [vmem:[#allocation6 + $0x8] sm:$0xff] %vm539, %v549
          %554 = vst.msk [vmem:[#allocation6 + $0x10] sm:$0xff] %vm539, %v550
          %555 = vst.msk [vmem:[#allocation6 + $0x18] sm:$0xff] %vm539, %v551
        $region48: #{tpu_custom_call.1} parent=31 // pred_fallthru
          _
        // Predicated region
        $region49: #{tpu_custom_call.1} parent=31 // pred_check
          %p556 = pneg %p506
        $region50: #{tpu_custom_call.1} parent=31 // pred_check_branch
          %558 = sbr.rel (%p556) target = $region52
        $region51: #{tpu_custom_call.1} parent=31 // pred_region
          %v559 = vld [vmem:[%s2] sm:$0xff]
          %v560 = vld [vmem:[%s2 + $0x8] sm:$0xff]
          %v561 = vld [vmem:[%s2 + $0x10] sm:$0xff]
          %v562 = vld [vmem:[%s2 + $0x18] sm:$0xff]
          %v563 = vld [vmem:[%s2] sm:$0x1]
          %565 = vset.pattern.permute.xlu0 0
          %566 = vperm.xlu0 %565, %v559
          %v567 = vpop.permute.xlu0 %566
          %570 = vset.pattern.permute.xlu0 0
          %571 = vperm.xlu0 %570, %v560
          %v572 = vpop.permute.xlu0 %571
          %575 = vset.pattern.permute.xlu0 0
          %576 = vperm.xlu0 %575, %v561
          %v577 = vpop.permute.xlu0 %576
          %580 = vset.pattern.permute.xlu0 0
          %581 = vperm.xlu0 %580, %v562
          %v582 = vpop.permute.xlu0 %581
          %v584 = vadd.f32 %v347, %v567
          %v585 = vadd.f32 %v349, %v567
          %v586 = vadd.f32 %v400, %v567
          %v587 = vadd.f32 %v351, %v572
          %v588 = vadd.f32 %v353, %v572
          %v589 = vadd.f32 %v403, %v572
          %v590 = vadd.f32 %v357, %v577
          %v591 = vadd.f32 %v359, %v577
          %v592 = vadd.f32 %v408, %v577
          %v593 = vadd.f32 %v361, %v582
          %v594 = vadd.f32 %v363, %v582
          %v595 = vadd.f32 %v411, %v582
          %v596 = vld [vmem:[#allocation5] sm:$0xff]
          %v597 = vld [vmem:[#allocation5 + $0x8] sm:$0xff]
          %v598 = vld [vmem:[#allocation5 + $0x10] sm:$0xff]
          %v599 = vld [vmem:[#allocation5 + $0x18] sm:$0xff]
          %601 = vset.pattern.permute.xlu0 0
          %602 = vperm.xlu0 %601, %v596
          %v603 = vpop.permute.xlu0 %602
          %606 = vset.pattern.permute.xlu0 0
          %607 = vperm.xlu0 %606, %v597
          %v608 = vpop.permute.xlu0 %607
          %611 = vset.pattern.permute.xlu0 0
          %612 = vperm.xlu0 %611, %v598
          %v613 = vpop.permute.xlu0 %612
          %616 = vset.pattern.permute.xlu0 0
          %617 = vperm.xlu0 %616, %v599
          %v618 = vpop.permute.xlu0 %617
          %v620 = vsub.f32 %v347, %v603
          %v621 = vsub.f32 %v349, %v603
          %v622 = vsub.f32 %v400, %v603
          %v623 = vsub.f32 %v351, %v608
          %v624 = vsub.f32 %v353, %v608
          %v625 = vsub.f32 %v403, %v608
          %v626 = vsub.f32 %v357, %v613
          %v627 = vsub.f32 %v359, %v613
          %v628 = vsub.f32 %v408, %v613
          %v629 = vsub.f32 %v361, %v618
          %v630 = vsub.f32 %v363, %v618
          %v631 = vsub.f32 %v411, %v618
          %v632 = vld [vmem:[#allocation6] sm:$0xff]
          %v633 = vld [vmem:[#allocation6 + $0x8] sm:$0xff]
          %v634 = vld [vmem:[#allocation6 + $0x10] sm:$0xff]
          %v635 = vld [vmem:[#allocation6 + $0x18] sm:$0xff]
          %637 = vset.pattern.permute.xlu0 0
          %638 = vperm.xlu0 %637, %v632
          %v639 = vpop.permute.xlu0 %638
          %642 = vset.pattern.permute.xlu0 0
          %643 = vperm.xlu0 %642, %v633
          %v644 = vpop.permute.xlu0 %643
          %647 = vset.pattern.permute.xlu0 0
          %648 = vperm.xlu0 %647, %v634
          %v649 = vpop.permute.xlu0 %648
          %652 = vset.pattern.permute.xlu0 0
          %653 = vperm.xlu0 %652, %v635
          %v654 = vpop.permute.xlu0 %653
          %v656 = vmul.f32 %v620, %v639
          %v657 = vmul.f32 %v621, %v639
          %v658 = vmul.f32 %v622, %v639
          %v659 = vmul.f32 %v623, %v644
          %v660 = vmul.f32 %v624, %v644
          %v661 = vmul.f32 %v625, %v644
          %v662 = vmul.f32 %v626, %v649
          %v663 = vmul.f32 %v627, %v649
          %v664 = vmul.f32 %v628, %v649
          %v665 = vmul.f32 %v629, %v654
          %v666 = vmul.f32 %v630, %v654
          %v667 = vmul.f32 %v631, %v654
          %v668 = vxor.u32 %v656, 2147483648
          %v669 = vxor.u32 %v657, 2147483648
          %v670 = vxor.u32 %v658, 2147483648
          %v671 = vxor.u32 %v659, 2147483648
          %v672 = vxor.u32 %v660, 2147483648
          %v673 = vxor.u32 %v661, 2147483648
          %v674 = vxor.u32 %v662, 2147483648
          %v675 = vxor.u32 %v663, 2147483648
          %v676 = vxor.u32 %v664, 2147483648
          %v677 = vxor.u32 %v665, 2147483648
          %v678 = vxor.u32 %v666, 2147483648
          %v679 = vxor.u32 %v667, 2147483648
          %v680 = vmul.f32 %v668, 1.442695
          %v681 = vpow.pop %v680
          %v682 = vmul.f32 %v669, 1.442695
          %v683 = vpow.pop %v682
          %v684 = vmul.f32 %v670, 1.442695
          %v685 = vpow.pop %v684
          %v686 = vmul.f32 %v671, 1.442695
          %v687 = vpow.pop %v686
          %v688 = vmul.f32 %v672, 1.442695
          %v689 = vpow.pop %v688
          %v690 = vmul.f32 %v673, 1.442695
          %v691 = vpow.pop %v690
          %v692 = vmul.f32 %v674, 1.442695
          %v693 = vpow.pop %v692
          %v694 = vmul.f32 %v675, 1.442695
          %v695 = vpow.pop %v694
          %v696 = vmul.f32 %v676, 1.442695
          %v697 = vpow.pop %v696
          %v698 = vmul.f32 %v677, 1.442695
          %v699 = vpow.pop %v698
          %v700 = vmul.f32 %v678, 1.442695
          %v701 = vpow.pop %v700
          %v702 = vmul.f32 %v679, 1.442695
          %v703 = vpow.pop %v702
          %v704 = vadd.f32 %v681, 1.0
          %v705 = vadd.f32 %v683, 1.0
          %v706 = vadd.f32 %v685, 1.0
          %v707 = vadd.f32 %v687, 1.0
          %v708 = vadd.f32 %v689, 1.0
          %v709 = vadd.f32 %v691, 1.0
          %v710 = vadd.f32 %v693, 1.0
          %v711 = vadd.f32 %v695, 1.0
          %v712 = vadd.f32 %v697, 1.0
          %v713 = vadd.f32 %v699, 1.0
          %v714 = vadd.f32 %v701, 1.0
          %v715 = vadd.f32 %v703, 1.0
          %v716 = vrcp.pop %v704
          %v717 = vmul.f32 1.0, %v716
          %v718 = vrcp.pop %v705
          %v719 = vmul.f32 1.0, %v718
          %v720 = vrcp.pop %v706
          %v721 = vmul.f32 1.0, %v720
          %v722 = vrcp.pop %v707
          %v723 = vmul.f32 1.0, %v722
          %v724 = vrcp.pop %v708
          %v725 = vmul.f32 1.0, %v724
          %v726 = vrcp.pop %v709
          %v727 = vmul.f32 1.0, %v726
          %v728 = vrcp.pop %v710
          %v729 = vmul.f32 1.0, %v728
          %v730 = vrcp.pop %v711
          %v731 = vmul.f32 1.0, %v730
          %v732 = vrcp.pop %v712
          %v733 = vmul.f32 1.0, %v732
          %v734 = vrcp.pop %v713
          %v735 = vmul.f32 1.0, %v734
          %v736 = vrcp.pop %v714
          %v737 = vmul.f32 1.0, %v736
          %v738 = vrcp.pop %v715
          %v739 = vmul.f32 1.0, %v738
          %v740 = vsub.f32 1.0, %v717
          %v741 = vsub.f32 1.0, %v719
          %v742 = vsub.f32 1.0, %v721
          %v743 = vsub.f32 1.0, %v723
          %v744 = vsub.f32 1.0, %v725
          %v745 = vsub.f32 1.0, %v727
          %v746 = vsub.f32 1.0, %v729
          %v747 = vsub.f32 1.0, %v731
          %v748 = vsub.f32 1.0, %v733
          %v749 = vsub.f32 1.0, %v735
          %v750 = vsub.f32 1.0, %v737
          %v751 = vsub.f32 1.0, %v739
          %752 = vset.pattern.permute.xlu0 1
          %753 = vperm.xlu0 %752, %v559
          %v754 = vpop.permute.xlu0 %753
          %756 = vset.pattern.permute.xlu0 1
          %757 = vperm.xlu0 %756, %v560
          %v758 = vpop.permute.xlu0 %757
          %760 = vset.pattern.permute.xlu0 1
          %761 = vperm.xlu0 %760, %v561
          %v762 = vpop.permute.xlu0 %761
          %764 = vset.pattern.permute.xlu0 1
          %765 = vperm.xlu0 %764, %v562
          %v766 = vpop.permute.xlu0 %765
          %v768 = vmul.f32 %v754, %v740
          %v769 = vmul.f32 %v754, %v741
          %v770 = vmul.f32 %v754, %v742
          %v771 = vmul.f32 %v758, %v743
          %v772 = vmul.f32 %v758, %v744
          %v773 = vmul.f32 %v758, %v745
          %v774 = vmul.f32 %v762, %v746
          %v775 = vmul.f32 %v762, %v747
          %v776 = vmul.f32 %v762, %v748
          %v777 = vmul.f32 %v766, %v749
          %v778 = vmul.f32 %v766, %v750
          %v779 = vmul.f32 %v766, %v751
          %v780 = vadd.f32 %v717, %v768
          %v781 = vadd.f32 %v719, %v769
          %v782 = vadd.f32 %v721, %v770
          %v783 = vadd.f32 %v723, %v771
          %v784 = vadd.f32 %v725, %v772
          %v785 = vadd.f32 %v727, %v773
          %v786 = vadd.f32 %v729, %v774
          %v787 = vadd.f32 %v731, %v775
          %v788 = vadd.f32 %v733, %v776
          %v789 = vadd.f32 %v735, %v777
          %v790 = vadd.f32 %v737, %v778
          %v791 = vadd.f32 %v739, %v779
          %v792 = vmul.f32 %v780, %v584
          %v793 = vmul.f32 %v781, %v585
          %v794 = vmul.f32 %v782, %v586
          %v795 = vmul.f32 %v783, %v587
          %v796 = vmul.f32 %v784, %v588
          %v797 = vmul.f32 %v785, %v589
          %v798 = vmul.f32 %v786, %v590
          %v799 = vmul.f32 %v787, %v591
          %v800 = vmul.f32 %v788, %v592
          %v801 = vmul.f32 %v789, %v593
          %v802 = vmul.f32 %v790, %v594
          %v803 = vmul.f32 %v791, %v595
          %804 = vset.pattern.permute.xlu0 2
          %805 = vperm.xlu0 %804, %v559
          %v806 = vpop.permute.xlu0 %805
          %808 = vset.pattern.permute.xlu0 2
          %809 = vperm.xlu0 %808, %v560
          %v810 = vpop.permute.xlu0 %809
          %812 = vset.pattern.permute.xlu0 2
          %813 = vperm.xlu0 %812, %v561
          %v814 = vpop.permute.xlu0 %813
          %816 = vset.pattern.permute.xlu0 2
          %817 = vperm.xlu0 %816, %v562
          %v818 = vpop.permute.xlu0 %817
          %v820 = vmul.f32 %v792, %v806
          %v821 = vmul.f32 %v793, %v806
          %v822 = vmul.f32 %v794, %v806
          %v823 = vmul.f32 %v795, %v810
          %v824 = vmul.f32 %v796, %v810
          %v825 = vmul.f32 %v797, %v810
          %v826 = vmul.f32 %v798, %v814
          %v827 = vmul.f32 %v799, %v814
          %v828 = vmul.f32 %v800, %v814
          %v829 = vmul.f32 %v801, %v818
          %v830 = vmul.f32 %v802, %v818
          %v831 = vmul.f32 %v803, %v818
          %v832 = vadd.f32 %v820, %v823
          %v833 = vadd.f32 %v832, %v826
          %v834 = vadd.f32 %v833, %v829
          %v835 = vrot.slane %v834, 4
          %v836 = vadd.f32 %v834, %v835
          %v837 = vrot.slane %v836, 2
          %v838 = vadd.f32 %v836, %v837
          %v839 = vrot.slane %v838, 1
          %v840 = vadd.f32 %v838, %v839
          %v841 = vadd.f32 %v821, %v824
          %v842 = vadd.f32 %v841, %v827
          %v843 = vadd.f32 %v842, %v830
          %v844 = vrot.slane %v843, 4
          %v845 = vadd.f32 %v843, %v844
          %v846 = vrot.slane %v845, 2
          %v847 = vadd.f32 %v845, %v846
          %v848 = vrot.slane %v847, 1
          %v849 = vadd.f32 %v847, %v848
          %v850 = vadd.f32 %v822, %v825
          %v851 = vadd.f32 %v850, %v828
          %v852 = vadd.f32 %v851, %v831
          %v853 = vrot.slane %v852, 4
          %v854 = vadd.f32 %v852, %v853
          %v855 = vrot.slane %v854, 2
          %v856 = vadd.f32 %v854, %v855
          %v857 = vrot.slane %v856, 1
          %v858 = vadd.f32 %v856, %v857
          %860 = vset.pattern.permute.xlu0 3
          %861 = vperm.xlu0 %860, %v563
          %v862 = vpop.permute.xlu0 %861
          %v864 = vadd.f32 %v840, %v862
          %v865 = vadd.f32 %v849, %v862
          %v866 = vadd.f32 %v858, %v862
          %v870 = vcombine.low %v864, %v865
          %v872 = vunpack.c.l.s4 1966171168
          %v873 = vunpack.c.0.s8 %v872
          %v874 = vlaneseq
          %v875 = vshrl.u32 %v874, 7
          %v876 = vsub.s32 %v873, %v875
          %v877 = vrot.slane %v870, %v876
          %v879 = vunpack.c.l.s4 1966171168
          %v880 = vunpack.c.0.s8 %v879
          %v881 = vlaneseq
          %v882 = vshrl.u32 %v881, 7
          %v883 = vsub.s32 %v880, %v882
          %v884 = vrot.slane %v866, %v883
          %v885 = vcombine.low %v877, %v884
          %v887 = vunpack.c.l.s4 1966171168
          %v888 = vunpack.c.0.s8 %v887
          %v889 = vlaneseq
          %v890 = vshrl.u32 %v889, 7
          %v891 = vsub.s32 %v888, %v890
          %v892 = vrot.slane %v885, %v891
          %v894 = vlaneseq
          %vm895 = vcmp.ge.s32.totalorder %v894, 0
          %vm896 = vcmp.lt.s32.totalorder %v894, 384
          %vm897 = vmand %vm895, %vm896
          %898 = vst.msk [vmem:[#allocation10] sm:$0x7] %vm897, %v892
        $region52: #{tpu_custom_call.1} parent=31 // pred_fallthru
          _
        // Predicated region
        $region53: #{tpu_custom_call.1} parent=31 // pred_check
          %p899 = pneg %p114
        $region54: #{tpu_custom_call.1} parent=31 // pred_check_branch
          %901 = sbr.rel (%p899) target = $region56
        $region55: #{tpu_custom_call.1} parent=31 // pred_region
          %s902 = smul.u32 3, %s21
          %s904 = ssub.s32 48, 48
          %905 = vsyncadd [#allocation9], %s904
          %s906 = smul.addr %s902, 16
          %s907 = scalar_lea.hbm %s3, %s906
          %s909 = sshll.u32 [#allocation10], 4
          %s910 = int_to_ptr.vmem [resolvable:$true] %s909
          %912 = dma.vmem_to_hbm [thread:$0]  %s910, 48, %s907, [#allocation9]
        $region56: #{tpu_custom_call.1} parent=31 // pred_fallthru
          _
        // Predicated region
        $region57: #{tpu_custom_call.1} parent=31 // pred_check
          %p913 = pneg %p114
        $region58: #{tpu_custom_call.1} parent=31 // pred_check_branch
          %915 = sbr.rel (%p913) target = $region60
        $region59: #{tpu_custom_call.1} parent=31 // pred_region
          %916 = dma.done [#allocation9], 48
        $region60: #{tpu_custom_call.1} parent=31 // pred_fallthru
          _
      $region32: #{tpu_custom_call.1} parent=5 // pred_fallthru
        _
      %p917 = scmp.le.s32.totalorder 2, %s11
      // Predicated region
      $region61: #{tpu_custom_call.1} parent=5 // pred_check
        %p918 = pneg %p917
      $region62: #{tpu_custom_call.1} parent=5 // pred_check_branch
        %920 = sbr.rel (%p918) target = $region64
      $region63: #{tpu_custom_call.1} parent=5 // pred_region
        %s921 = ssub.s32 %s11, 2
      $region64: #{tpu_custom_call.1} parent=5 // pred_fallthru
        _
    $region6: #{tpu_custom_call.1} parent=1 // loop_footer
      %s15 = sadd.s32 1, %s11
    $region7: #{tpu_custom_call.1} parent=1 // loop_footer_branch
      %10 = sbr.rel target = $region3
    $region8: #{tpu_custom_call.1} parent=1 // loop_exit
      _
    %922 = vsyncpa [#allocation8], 1
    %s923 = scalar_lea.sflag [#allocation8], 1
    %924 = vsyncpa %s923, 1
    %925 = vsyncpa [#allocation9], 1
    %s926 = scalar_lea.sflag [#allocation9], 1
    %927 = vsyncpa %s926, 1

</llo_original>
